<compile_context>
chip_gen: v6e
topology: v6e:2x2x1
jax: 0.10.0
libtpu: 0.0.40
codegen_flags: <defaults>
</compile_context>

<pallas_src>
import functools

import jax
import jax.numpy as jnp
from jax import lax
from jax.experimental import pallas as pl
from jax.experimental.pallas import tpu as pltpu

LANE = 128
SUBLANE = 8
NUM_CHUNKS = 4  # torch.chunk(res, 4)


def mean_ep_kernel(x_ref, w_ref, b_ref, o_ref, *, tn, chunk, inv_chunk):
    # x_ref: (tn, d) f32      w_ref: (d, c_pad) f32    b_ref: (1, c_pad) f32
    # o_ref: (SUBLANE, c_pad) f32 -- per-chunk accumulator, resident across ti
    ti = pl.program_id(1)

    @pl.when(ti == 0)
    def _init():
        o_ref[...] = jnp.zeros_like(o_ref)

    # logits on the MXU with f32 accumulation (x arrives from HBM as f32 -- no
    # wrapper-side cast pass; the kernel is HBM-bandwidth bound)
    logits = jnp.dot(x_ref[...], w_ref[...],
                     preferred_element_type=jnp.float32) + b_ref[...]

    # numerically stable softmax over the lane-dense, 128-padded class axis
    # (padded classes carry bias -1e30 -> exp underflows to 0)
    m = jnp.max(logits, axis=-1, keepdims=True)
    e = jnp.exp(logits - m)
    probs = e / jnp.sum(e, axis=-1, keepdims=True)

    # mask rows beyond the end of this chunk (partial last tile); jnp.where is a
    # select, so any garbage/NaN from the out-of-bounds part of the block is
    # replaced by 0 rather than propagated.
    valid = chunk - ti * tn
    row_ids = lax.broadcasted_iota(jnp.int32, (probs.shape[0], 1), 0)
    probs = jnp.where(row_ids < valid, probs, 0.0)

    # per-tile row sum accumulated directly into the resident output block
    # (broadcasts across the 8 sublanes; wrapper reads row 0)
    o_ref[...] += jnp.sum(probs, axis=0, keepdims=True)

    @pl.when(ti == pl.num_programs(1) - 1)
    def _finalize():
        o_ref[...] = o_ref[...] * inv_chunk


def _pick_row_tile(chunk, max_tn):
    # Largest MXU/sublane-friendly tile that fits both the chunk and the VMEM
    # budget; a non-divisible chunk gets a masked partial tail tile instead of
    # falling back to a tiny tile.
    for cand in (2048, 1024, 512, 256, 128, 64, 32, 16, 8):
        if cand <= chunk and cand <= max_tn:
            return cand
    # tiny chunk (< 8 rows): one full-chunk tile (block == full array dim is
    # exempt from the sublane-multiple rule)
    return chunk


def model_mean_ep(x_nchw, w, b):
    """x_nchw: (N, C, H, W) float; w: (D, num_classes); b: (num_classes,)."""
    n = x_nchw.shape[0]
    d = int(x_nchw.shape[1] * x_nchw.shape[2] * x_nchw.shape[3])
    num_classes = w.shape[1]
    assert n % NUM_CHUNKS == 0, "batch must split into 4 equal chunks"
    chunk = n // NUM_CHUNKS

    # lane-dense class padding: zero weights, -1e30 bias -> padded probs ~ 0
    c_pad = pl.cdiv(num_classes, LANE) * LANE
    w_pad = jnp.zeros((d, c_pad), jnp.float32).at[:, :num_classes].set(
        w.astype(jnp.float32))
    b_pad = jnp.full((1, c_pad), -1e30, jnp.float32).at[:, :num_classes].set(
        b.astype(jnp.float32))

    # generation-aware VMEM budget (v5e/v6e: 128 MiB physical, v7x: 64 MiB)
    try:
        phys_vmem = int(pltpu.get_tpu_info().vmem_capacity_bytes)
    except Exception:  # conservative fallback if the query is unavailable
        phys_vmem = 64 << 20
    cap = phys_vmem * 3 // 4

    # resident W (worst case double-buffered) + bias + output slab
    fixed = 2 * d * c_pad * 4 + 4 * SUBLANE * c_pad * 4
    avail = int(cap * 0.7) - fixed
    if avail < 2 * SUBLANE * d * 4:
        # TODO(synk): add a K-tiled (reduction over d) path for huge feature dims
        raise NotImplementedError(
            "feature dim too large for the resident-W kernel; needs K-tiling")
    max_tn = avail // (2 * d * 4)  # double-buffered f32 x tiles

    tn = _pick_row_tile(chunk, max_tn)
    tiles_per_chunk = pl.cdiv(chunk, tn)

    # free reshapes only -- no extra HBM pass, no dtype change for x
    x_3d = x_nchw.astype(jnp.float32).reshape(n, d).reshape(NUM_CHUNKS, chunk, d)

    vmem_need = 2 * tn * d * 4 + fixed
    vmem_limit = int(min(max(vmem_need * 3 // 2, 8 << 20), cap))

    kernel = functools.partial(mean_ep_kernel, tn=tn, chunk=chunk,
                               inv_chunk=1.0 / chunk)

    out = pl.pallas_call(
        kernel,
        out_shape=jax.ShapeDtypeStruct((NUM_CHUNKS, SUBLANE, c_pad), jnp.float32),
        grid=(NUM_CHUNKS, tiles_per_chunk),
        in_specs=[
            # x row tiles, chunk-aligned; partial tail tile masked in-kernel
            pl.BlockSpec((None, tn, d), lambda ci, ti: (ci, ti, 0)),
            pl.BlockSpec((d, c_pad), lambda ci, ti: (0, 0)),   # W resident
            pl.BlockSpec((1, c_pad), lambda ci, ti: (0, 0)),   # bias resident
        ],
        # per-chunk output block: constant across the reduction (ti) axis,
        # distinct per chunk so the parallel axis can be megacore-sharded
        out_specs=pl.BlockSpec((None, SUBLANE, c_pad), lambda ci, ti: (ci, 0, 0)),
        compiler_params=pltpu.CompilerParams(
            dimension_semantics=("parallel", "arbitrary"),
            vmem_limit_bytes=vmem_limit),
    )(x_3d, w_pad, b_pad)

    # drop sublane broadcast + class padding; torch.cat of 1-D means -> flat
    return out[:, 0, :num_classes].reshape(-1)


def reference(x_nchw, w, b):
    n = x_nchw.shape[0]
    x_flat = x_nchw.reshape(n, -1).astype(jnp.float32)
    logits = x_flat @ w.astype(jnp.float32) + b.astype(jnp.float32)
    probs = jax.nn.softmax(logits, axis=-1)
    chunk = n // NUM_CHUNKS
    return jnp.concatenate(
        [probs[i * chunk:(i + 1) * chunk].mean(0) for i in range(NUM_CHUNKS)],
        axis=0)


if __name__ == "__main__":
    key = jax.random.PRNGKey(0)
    k_x, k_w, k_b = jax.random.split(key, 3)

    # Small CIFAR-like shapes: batch=8 (4 chunks of 2), 4 channels, 16x16
    # spatial, 10 output classes.
    N, C, H, W = 8, 4, 16, 16
    NUM_CLASSES = 10
    D = C * H * W

    x = jax.random.normal(k_x, (N, C, H, W), dtype=jnp.float32)
    w = jax.random.normal(k_w, (D, NUM_CLASSES), dtype=jnp.float32) * 0.02
    b = jax.random.normal(k_b, (NUM_CLASSES,), dtype=jnp.float32) * 0.1

    out = model_mean_ep(x, w, b)
    jax.block_until_ready(out)

    ref = reference(x, w, b)
    assert out.shape == (4 * NUM_CLASSES,)
    assert jnp.allclose(out, ref, atol=2e-2, rtol=2e-2), (
        f"mismatch: max abs err {jnp.max(jnp.abs(out - ref))}")

    print("KERNEL_OK")
</pallas_src>

<mosaic_0001>
module attributes {stable_mosaic.version = 11 : i64} {
  func.func @mean_ep_kernel(%arg0: i32, %arg1: i32, %arg2: memref<1x2x1024xf32, #tpu.memory_space<vmem>>, %arg3: memref<1024x128xf32, #tpu.memory_space<vmem>>, %arg4: memref<1x128xf32, #tpu.memory_space<vmem>>, %arg5: memref<1x8x128xf32, #tpu.memory_space<vmem>>) attributes {dimension_semantics = [#tpu.dimension_semantics<parallel>, #tpu.dimension_semantics<arbitrary>], iteration_bounds = array<i64: 4, 1>, scalar_prefetch = 0 : i64, scratch_operands = 0 : i64, tpu.core_type = #tpu.core_type<tc>, window_params = [{transform_indices = @transform_0, window_bounds = array<i64: 1, 2, 1024>}, {pipeline_mode = #tpu.pipeline_mode<synchronous>, transform_indices = @transform_1, window_bounds = array<i64: 1024, 128>}, {pipeline_mode = #tpu.pipeline_mode<synchronous>, transform_indices = @transform_2, window_bounds = array<i64: 1, 128>}, {transform_indices = @transform_3, window_bounds = array<i64: 1, 8, 128>}]} {
    %c0_i32 = arith.constant 0 : i32
    %0 = arith.cmpi eq, %arg1, %c0_i32 : i32
    %1 = arith.extui %0 : i1 to i32
    %c0_i32_0 = arith.constant 0 : i32
    %2 = arith.cmpi ne, %1, %c0_i32_0 : i32
    scf.if %2 {
      %cst_20 = arith.constant 0.000000e+00 : f32
      %40 = vector.broadcast %cst_20 : f32 to vector<8x128xf32>
      %c0_21 = arith.constant 0 : index
      %c0_22 = arith.constant 0 : index
      %c0_23 = arith.constant 0 : index
      %41 = vector.load %arg5[%c0_21, %c0_22, %c0_23] : memref<1x8x128xf32, #tpu.memory_space<vmem>>, vector<1x8x128xf32>
      %42 = vector.shape_cast %41 : vector<1x8x128xf32> to vector<8x128xf32>
      %43 = vector.shape_cast %40 : vector<8x128xf32> to vector<1x8x128xf32>
      tpu.vector_store %arg5[%c0_21, %c0_22, %c0_23], %43 {strides = array<i32>} : memref<1x8x128xf32, #tpu.memory_space<vmem>>, vector<1x8x128xf32>,
    } else {
    }
    %c0 = arith.constant 0 : index
    %c0_1 = arith.constant 0 : index
    %c0_2 = arith.constant 0 : index
    %3 = vector.load %arg2[%c0, %c0_1, %c0_2] : memref<1x2x1024xf32, #tpu.memory_space<vmem>>, vector<1x2x1024xf32>
    %4 = vector.shape_cast %3 : vector<1x2x1024xf32> to vector<2x1024xf32>
    %c0_3 = arith.constant 0 : index
    %c0_4 = arith.constant 0 : index
    %5 = vector.load %arg3[%c0_3, %c0_4] : memref<1024x128xf32, #tpu.memory_space<vmem>>, vector<1024x128xf32>
    %cst = arith.constant dense<0.000000e+00> : vector<2x128xf32>
    %6 = tpu.matmul %4, %5, %cst {dimension_numbers = #tpu.dot_dimension_numbers<[1], [0], [0], [1], [0, 0, 1, 1], [], []>} : vector<2x1024xf32>, vector<1024x128xf32>, vector<2x128xf32> -> vector<2x128xf32>
    %c0_5 = arith.constant 0 : index
    %c0_6 = arith.constant 0 : index
    %7 = vector.load %arg4[%c0_5, %c0_6] : memref<1x128xf32, #tpu.memory_space<vmem>>, vector<1x128xf32>
    %8 = vector.broadcast %7 : vector<1x128xf32> to vector<2x128xf32>
    %9 = arith.addf %6, %8 : vector<2x128xf32>
    %cst_7 = arith.constant dense<0xFF800000> : vector<2xf32>
    %10 = vector.multi_reduction <maximumf>, %9, %cst_7 [1] : vector<2x128xf32> to vector<2xf32>
    %11 = vector.shape_cast %10 : vector<2xf32> to vector<2x1xf32>
    %12 = vector.broadcast %11 : vector<2x1xf32> to vector<2x128xf32>
    %13 = arith.subf %9, %12 : vector<2x128xf32>
    %14 = math.exp %13 : vector<2x128xf32>
    %cst_8 = arith.constant dense<0.000000e+00> : vector<2xf32>
    %15 = vector.multi_reduction <add>, %14, %cst_8 [1] : vector<2x128xf32> to vector<2xf32>
    %16 = vector.shape_cast %15 : vector<2xf32> to vector<2x1xf32>
    %17 = vector.broadcast %16 : vector<2x1xf32> to vector<2x128xf32>
    %18 = arith.divf %14, %17 : vector<2x128xf32>
    %c2_i32 = arith.constant 2 : i32
    %19 = arith.muli %arg1, %c2_i32 : i32
    %c2_i32_9 = arith.constant 2 : i32
    %20 = arith.subi %c2_i32_9, %19 : i32
    %21 = tpu.iota {dimensions = array<i32: 0>} : vector<2x1xi32>
    %22 = vector.broadcast %20 : i32 to vector<2x1xi32>
    %23 = arith.cmpi slt, %21, %22 : vector<2x1xi32>
    %cst_10 = arith.constant 0.000000e+00 : f32
    %24 = vector.shape_cast %23 : vector<2x1xi1> to vector<2x1xi1>
    %25 = vector.broadcast %24 : vector<2x1xi1> to vector<2x128xi1>
    %26 = vector.broadcast %cst_10 : f32 to vector<2x128xf32>
    %27 = arith.select %25, %18, %26 : vector<2x128xi1>, vector<2x128xf32>
    %c0_11 = arith.constant 0 : index
    %c0_12 = arith.constant 0 : index
    %c0_13 = arith.constant 0 : index
    %28 = vector.load %arg5[%c0_11, %c0_12, %c0_13] : memref<1x8x128xf32, #tpu.memory_space<vmem>>, vector<1x8x128xf32>
    %29 = vector.shape_cast %28 : vector<1x8x128xf32> to vector<8x128xf32>
    %cst_14 = arith.constant dense<0.000000e+00> : vector<128xf32>
    %30 = vector.multi_reduction <add>, %27, %cst_14 [0] : vector<2x128xf32> to vector<128xf32>
    %31 = vector.shape_cast %30 : vector<128xf32> to vector<1x128xf32>
    %32 = vector.broadcast %31 : vector<1x128xf32> to vector<8x128xf32>
    %33 = arith.addf %29, %32 : vector<8x128xf32>
    %c0_15 = arith.constant 0 : index
    %c0_16 = arith.constant 0 : index
    %c0_17 = arith.constant 0 : index
    %34 = vector.load %arg5[%c0_15, %c0_16, %c0_17] : memref<1x8x128xf32, #tpu.memory_space<vmem>>, vector<1x8x128xf32>
    %35 = vector.shape_cast %34 : vector<1x8x128xf32> to vector<8x128xf32>
    %36 = vector.shape_cast %33 : vector<8x128xf32> to vector<1x8x128xf32>
    tpu.vector_store %arg5[%c0_15, %c0_16, %c0_17], %36 {strides = array<i32>} : memref<1x8x128xf32, #tpu.memory_space<vmem>>, vector<1x8x128xf32>,
    %c0_i32_18 = arith.constant 0 : i32
    %37 = arith.cmpi eq, %arg1, %c0_i32_18 : i32
    %38 = arith.extui %37 : i1 to i32
    %c0_i32_19 = arith.constant 0 : i32
    %39 = arith.cmpi ne, %38, %c0_i32_19 : i32
    scf.if %39 {
      %c0_20 = arith.constant 0 : index
      %c0_21 = arith.constant 0 : index
      %c0_22 = arith.constant 0 : index
      %40 = vector.load %arg5[%c0_20, %c0_21, %c0_22] : memref<1x8x128xf32, #tpu.memory_space<vmem>>, vector<1x8x128xf32>
      %41 = vector.shape_cast %40 : vector<1x8x128xf32> to vector<8x128xf32>
      %cst_23 = arith.constant 5.000000e-01 : f32
      %42 = vector.broadcast %cst_23 : f32 to vector<8x128xf32>
      %43 = arith.mulf %41, %42 : vector<8x128xf32>
      %c0_24 = arith.constant 0 : index
      %c0_25 = arith.constant 0 : index
      %c0_26 = arith.constant 0 : index
      %44 = vector.load %arg5[%c0_24, %c0_25, %c0_26] : memref<1x8x128xf32, #tpu.memory_space<vmem>>, vector<1x8x128xf32>
      %45 = vector.shape_cast %44 : vector<1x8x128xf32> to vector<8x128xf32>
      %46 = vector.shape_cast %43 : vector<8x128xf32> to vector<1x8x128xf32>
      tpu.vector_store %arg5[%c0_24, %c0_25, %c0_26], %46 {strides = array<i32>} : memref<1x8x128xf32, #tpu.memory_space<vmem>>, vector<1x8x128xf32>,
    } else {
    }
    return
  }
  func.func @transform_0(%arg0: i32, %arg1: i32) -> (i32, i32, i32) {
    %c0_i32 = arith.constant 0 : i32
    %c0_i32_0 = arith.constant 0 : i32
    return %arg0, %arg1, %c0_i32 : i32, i32, i32
  }
  func.func @transform_1(%arg0: i32, %arg1: i32) -> (i32, i32) {
    %c0_i32 = arith.constant 0 : i32
    %c0_i32_0 = arith.constant 0 : i32
    %c0_i32_1 = arith.constant 0 : i32
    return %c0_i32, %c0_i32_0 : i32, i32
  }
  func.func @transform_2(%arg0: i32, %arg1: i32) -> (i32, i32) {
    %c0_i32 = arith.constant 0 : i32
    %c0_i32_0 = arith.constant 0 : i32
    %c0_i32_1 = arith.constant 0 : i32
    return %c0_i32, %c0_i32_0 : i32, i32
  }
  func.func @transform_3(%arg0: i32, %arg1: i32) -> (i32, i32, i32) {
    %c0_i32 = arith.constant 0 : i32
    %c0_i32_0 = arith.constant 0 : i32
    %c0_i32_1 = arith.constant 0 : i32
    return %arg0, %c0_i32, %c0_i32_0 : i32, i32, i32
  }
}

</mosaic_0001>

<llo_original>
// kernel: tpu_custom_call.1
$region0: #{tpu_custom_call.1}
  #allocation0 [shape = 'u32[]', space=smem, size = 0x4, offset = 0x4, fixed_abs, tag = 'smem constant byte address 0x4 - core index']
  #allocation1 [shape = 'u32[144,128]{1,0:T(1,128)}', space=vmem, size = 0x12000, scoped, tag = 'internal scratch']
  %s0 = inlined_call_operand.hbm [shape: f32[4,2,1024], index: 0, kind: input, shape index: {}]
  %s1 = inlined_call_operand.hbm [shape: f32[1024,128], index: 1, kind: input, shape index: {}]
  %s2 = inlined_call_operand.vmem [shape: f32[1,128], index: 2, kind: input, shape index: {}]
  %s3 = inlined_call_operand.hbm [shape: f32[4,8,128], index: 3, kind: output, shape index: {}]
  %s4 = sld [smem:[#allocation0]]
  $region61: #{tpu_custom_call.1} parent=0
    _
  %s6 = ssub.s32 1, %s4
  %s7 = scalar_select 0, %s6, %s4
  $region1: #{tpu_custom_call.1} parent=0
    #allocation2 [shape = 'u8[16384]{0}', space=vmem, size = 0x4000, scoped, tag = 'input window, operand 0']
    #allocation3 [shape = 's32[2]{0}', space=sflag, size = 0x8, scoped, tag = 'scoped memory for tpu_custom_call.1']
    #allocation4 [shape = 's32[2]{0}', space=sflag, size = 0x8, scoped, tag = 'scoped memory for tpu_custom_call.1']
    #allocation5 [shape = 'u8[524288]{0}', space=vmem, size = 0x80000, scoped, tag = 'input window, operand 1, single buffered']
    #allocation6 [shape = 's32[1]{0}', space=sflag, size = 0x4, scoped, tag = 'scoped memory for tpu_custom_call.1']
    #allocation7 [shape = 'u8[8192]{0}', space=vmem, size = 0x2000, scoped, tag = 'output window, operand 0']
    %8 = vsyncpa [#allocation3], 0
    %s9 = scalar_lea.sflag [#allocation3], 1
    %10 = vsyncpa %s9, 0
    %11 = vsyncpa [#allocation6], 0
    %12 = vsyncpa [#allocation4], 0
    %s13 = scalar_lea.sflag [#allocation4], 1
    %14 = vsyncpa %s13, 0
    loop: start=0, step=1, limit=6
    $region2: #{tpu_custom_call.1} parent=1 // loop_pre_header
      _
    $region3: #{tpu_custom_call.1} parent=1 // loop_header
      %s16 = sphi 0, %s20
      %p17 = scmp.ge.s32.totalorder %s16, 6
      %s23 = sphi 0, %s35
      %s24 = sphi 0, %s31
      %s25 = sphi 0, %s23
      %s26 = sphi 0, %s24
      %s27 = sphi 0, %s25
      %s28 = sphi 0, %s26
      %s40 = sphi 0, %s42
      %s43 = sphi 0, %s40
      %s44 = sphi 0, %s43
      %s60 = sphi 0, %s44
      %s64 = sphi 0, %s64
      %s66 = sphi 0, %s64
      %s67 = sphi 0, %s66
      %s81 = sphi 0, %s67
      %s85 = sphi 0, %s85
      %s87 = sphi 0, %s85
      %s88 = sphi 0, %s87
      %s102 = sphi 0, %s88
      %s108 = sphi 0, %s110
      %s111 = sphi 0, %s108
      %s112 = sphi 0, %s111
      %s128 = sphi 0, %s112
    $region4: #{tpu_custom_call.1} parent=1 // loop_header_branch
      %19 = sbr.rel (%p17) target = $region8
    $region5: #{tpu_custom_call.1} parent=1 // loop_body
      %s21 = ssub.s32 %s16, 1
      %s22 = ssub.s32 %s16, 2
      %s29 = sadd.s32 1, %s24
      %p30 = scmp.ge.s32.totalorder %s29, 1
      %s31 = scalar_select %p30, 0, %s29
      %s32 = sadd.s32 1, %s23
      %s33 = scalar_select %p30, %s32, %s23
      %p34 = scmp.ge.s32.totalorder %s33, 4
      %s35 = scalar_select %p34, 0, %s33
      %s36 = ssub.s32 %s23, %s35
      %s37 = ssub.s32 %s24, %s31
      %s38 = sor.u32 %s36, %s37
      %p39 = scmp.eq.s32.totalorder %s38, 0
      %s41 = sadd.s32 %s40, 1
      %s42 = scalar_select %p39, %s40, %s41
      %p45 = pneg %p39
      %p46 = scmp.eq.s32.totalorder %s16, 3
      %p47 = por %p45, %p46
      %p48 = scmp.ne.s32.totalorder %s40, %s43
      %p49 = scmp.eq.s32.totalorder %s16, 0
      %p50 = por %p48, %p49
      %p51 = scmp.ne.s32.totalorder %s40, %s43
      %p52 = scmp.eq.s32.totalorder %s21, 3
      %p53 = por %p51, %p52
      %p54 = scmp.ne.s32.totalorder %s43, %s44
      %p55 = scmp.eq.s32.totalorder %s21, 0
      %p56 = por %p54, %p55
      %p57 = scmp.ne.s32.totalorder %s43, %s44
      %p58 = scmp.eq.s32.totalorder %s22, 3
      %p59 = por %p57, %p58
      %p61 = scmp.ne.s32.totalorder %s44, %s60
      %p62 = scmp.eq.s32.totalorder %s22, 0
      %p63 = por %p61, %p62
      %s65 = sadd.s32 %s64, 1
      %p68 = scmp.eq.s32.totalorder %s16, 3
      %p69 = scmp.ne.s32.totalorder %s64, %s66
      %p70 = scmp.eq.s32.totalorder %s16, 0
      %p71 = por %p69, %p70
      %p72 = scmp.ne.s32.totalorder %s64, %s66
      %p73 = scmp.eq.s32.totalorder %s21, 3
      %p74 = por %p72, %p73
      %p75 = scmp.ne.s32.totalorder %s66, %s67
      %p76 = scmp.eq.s32.totalorder %s21, 0
      %p77 = por %p75, %p76
      %p78 = scmp.ne.s32.totalorder %s66, %s67
      %p79 = scmp.eq.s32.totalorder %s22, 3
      %p80 = por %p78, %p79
      %p82 = scmp.ne.s32.totalorder %s67, %s81
      %p83 = scmp.eq.s32.totalorder %s22, 0
      %p84 = por %p82, %p83
      %s86 = sadd.s32 %s85, 1
      %p89 = scmp.eq.s32.totalorder %s16, 3
      %p90 = scmp.ne.s32.totalorder %s85, %s87
      %p91 = scmp.eq.s32.totalorder %s16, 0
      %p92 = por %p90, %p91
      %p93 = scmp.ne.s32.totalorder %s85, %s87
      %p94 = scmp.eq.s32.totalorder %s21, 3
      %p95 = por %p93, %p94
      %p96 = scmp.ne.s32.totalorder %s87, %s88
      %p97 = scmp.eq.s32.totalorder %s21, 0
      %p98 = por %p96, %p97
      %p99 = scmp.ne.s32.totalorder %s87, %s88
      %p100 = scmp.eq.s32.totalorder %s22, 3
      %p101 = por %p99, %p100
      %p103 = scmp.ne.s32.totalorder %s88, %s102
      %p104 = scmp.eq.s32.totalorder %s22, 0
      %p105 = por %p103, %p104
      %s106 = ssub.s32 %s23, %s35
      %p107 = scmp.eq.s32.totalorder %s106, 0
      %s109 = sadd.s32 %s108, 1
      %s110 = scalar_select %p107, %s108, %s109
      %p113 = pneg %p107
      %p114 = scmp.eq.s32.totalorder %s16, 3
      %p115 = por %p113, %p114
      %p116 = scmp.ne.s32.totalorder %s108, %s111
      %p117 = scmp.eq.s32.totalorder %s16, 0
      %p118 = por %p116, %p117
      %p119 = scmp.ne.s32.totalorder %s108, %s111
      %p120 = scmp.eq.s32.totalorder %s21, 3
      %p121 = por %p119, %p120
      %p122 = scmp.ne.s32.totalorder %s111, %s112
      %p123 = scmp.eq.s32.totalorder %s21, 0
      %p124 = por %p122, %p123
      %p125 = scmp.ne.s32.totalorder %s111, %s112
      %p126 = scmp.eq.s32.totalorder %s22, 3
      %p127 = por %p125, %p126
      %p129 = scmp.ne.s32.totalorder %s112, %s128
      %p130 = scmp.eq.s32.totalorder %s22, 0
      %p131 = por %p129, %p130
      %p132 = scmp.le.s32.totalorder 1, %s16
      %p133 = scmp.lt.s32.totalorder %s16, 5
      %p134 = pnand %p132, %p133
      %p135 = pneg %p134
      // Predicated region
      $region9: #{tpu_custom_call.1} parent=5 // pred_check
        _
      $region10: #{tpu_custom_call.1} parent=5 // pred_check_branch
        %137 = sbr.rel (%p134) target = $region12
      $region11: #{tpu_custom_call.1} parent=5 // pred_region
        %s138 = ssub.s32 %s16, 1
        // Predicated region
        $region13: #{tpu_custom_call.1} parent=11 // pred_check
          %p139 = pneg %p77
        $region14: #{tpu_custom_call.1} parent=11 // pred_check_branch
          %141 = sbr.rel (%p139) target = $region16
        $region15: #{tpu_custom_call.1} parent=11 // pred_region
          %s143 = ssub.s32 16384, 16384
          %144 = vsyncadd [#allocation6], %s143
          %s145 = sshll.u32 [#allocation5], 4
          %s146 = int_to_ptr.vmem [resolvable:$true] %s145
          %151 = dma.hbm_to_vmem [thread:$0]  %s1, 16384, %s146, [#allocation6], 128, 128, 8
        $region16: #{tpu_custom_call.1} parent=11 // pred_fallthru
          _
        // Predicated region
        $region17: #{tpu_custom_call.1} parent=11 // pred_check
          %p152 = pneg %p98
        $region18: #{tpu_custom_call.1} parent=11 // pred_check_branch
          %154 = sbr.rel (%p152) target = $region20
        $region19: #{tpu_custom_call.1} parent=11 // pred_region
          _
        $region20: #{tpu_custom_call.1} parent=11 // pred_fallthru
          _
      $region12: #{tpu_custom_call.1} parent=5 // pred_fallthru
        _
      %p155 = scmp.lt.s32.totalorder %s16, 4
      // Predicated region
      $region21: #{tpu_custom_call.1} parent=5 // pred_check
        %p156 = pneg %p155
      $region22: #{tpu_custom_call.1} parent=5 // pred_check_branch
        %158 = sbr.rel (%p156) target = $region24
      $region23: #{tpu_custom_call.1} parent=5 // pred_region
        // Predicated region
        $region25: #{tpu_custom_call.1} parent=23 // pred_check
          %p159 = pneg %p50
        $region26: #{tpu_custom_call.1} parent=23 // pred_check_branch
          %161 = sbr.rel (%p159) target = $region28
        $region27: #{tpu_custom_call.1} parent=23 // pred_region
          %s162 = sand.u32 %s40, 1
          %s163 = scalar_lea.sflag [#allocation3], %s162
          %s164 = sand.u32 %s40, 1
          %s165 = smul.addr %s164, 16
          %s166 = scalar_lea.vmem [#allocation2], %s165
          %s168 = ssub.s32 256, 256
          %169 = vsyncadd %s163, %s168
          %s170 = smul.addr %s24, 8
          %s171 = smul.addr %s23, 8
          %s172 = sadd.s32 %s170, %s171
          %s173 = smul.addr %s172, 32
          %s174 = scalar_lea.hbm %s0, %s173
          %s176 = sshll.u32 %s166, 4
          %s177 = int_to_ptr.vmem [resolvable:$true] %s176
          %179 = dma.hbm_to_vmem [thread:$0]  %s174, 256, %s177, %s163
        $region28: #{tpu_custom_call.1} parent=23 // pred_fallthru
          _
      $region24: #{tpu_custom_call.1} parent=5 // pred_fallthru
        _
      %p180 = scmp.le.s32.totalorder 1, %s16
      %p181 = scmp.lt.s32.totalorder %s16, 5
      %p182 = pnand %p180, %p181
      %p183 = pneg %p182
      // Predicated region
      $region29: #{tpu_custom_call.1} parent=5 // pred_check
        _
      $region30: #{tpu_custom_call.1} parent=5 // pred_check_branch
        %185 = sbr.rel (%p182) target = $region32
      $region31: #{tpu_custom_call.1} parent=5 // pred_region
        %s186 = ssub.s32 %s16, 1
        %s187 = sand.u32 %s43, 1
        %s188 = scalar_lea.sflag [#allocation3], %s187
        %s189 = sand.u32 %s43, 1
        %s190 = smul.addr %s189, 16
        %s191 = scalar_lea.vmem [#allocation2], %s190
        // Predicated region
        $region33: #{tpu_custom_call.1} parent=31 // pred_check
          %p192 = pneg %p56
        $region34: #{tpu_custom_call.1} parent=31 // pred_check_branch
          %194 = sbr.rel (%p192) target = $region36
        $region35: #{tpu_custom_call.1} parent=31 // pred_region
          %195 = dma.done %s188, 256
        $region36: #{tpu_custom_call.1} parent=31 // pred_fallthru
          _
        // Predicated region
        $region37: #{tpu_custom_call.1} parent=31 // pred_check
          %p196 = pneg %p77
        $region38: #{tpu_custom_call.1} parent=31 // pred_check_branch
          %198 = sbr.rel (%p196) target = $region40
        $region39: #{tpu_custom_call.1} parent=31 // pred_region
          %199 = dma.done [#allocation6], 16384
        $region40: #{tpu_custom_call.1} parent=31 // pred_fallthru
          _
        %s200 = sand.u32 %s43, 1
        %s201 = scalar_lea.sflag [#allocation3], %s200
        %s202 = sand.u32 %s43, 1
        %s203 = smul.addr %s202, 16
        %s204 = scalar_lea.vmem [#allocation2], %s203
        %p205 = pneg %p56
        %p206 = pneg %p53
        %p207 = pneg %p77
        %p208 = pneg %p74
        %p209 = pneg %p98
        %p210 = pneg %p95
        %p211 = pneg %p124
        %p212 = pneg %p121
        %s213 = sand.u32 %s111, 1
        %s214 = scalar_lea.sflag [#allocation4], %s213
        %s215 = sand.u32 %s111, 1
        %s216 = smul.addr %s215, 8
        %s217 = scalar_lea.vmem [#allocation7], %s216
        %p218 = scmp.eq.s32.totalorder %s26, 0
        // Predicated region
        $region41: #{tpu_custom_call.1} parent=31 // pred_check
          %p219 = pneg %p218
        $region42: #{tpu_custom_call.1} parent=31 // pred_check_branch
          %221 = sbr.rel (%p219) target = $region44
        $region43: #{tpu_custom_call.1} parent=31 // pred_region
          %222 = vst [vmem:[%s217] sm:$0xff] 0.0
        $region44: #{tpu_custom_call.1} parent=31 // pred_fallthru
          _
        %v223 = vld [vmem:[%s191] sm:$0xff]
        %v224 = vld [vmem:[%s191 + $0x8] sm:$0xff]
        %v225 = vld [vmem:[#allocation5] sm:$0xff]
        %v226 = vld [vmem:[#allocation5 + $0x8] sm:$0xff]
        %v227 = vld [vmem:[#allocation5 + $0x10] sm:$0xff]
        %v228 = vld [vmem:[#allocation5 + $0x18] sm:$0xff]
        %v229 = vld [vmem:[#allocation5 + $0x20] sm:$0xff]
        %v230 = vld [vmem:[#allocation5 + $0x28] sm:$0xff]
        %v231 = vld [vmem:[#allocation5 + $0x30] sm:$0xff]
        %v232 = vld [vmem:[#allocation5 + $0x38] sm:$0xff]
        %v233 = vld [vmem:[#allocation5 + $0x40] sm:$0xff]
        %v234 = vld [vmem:[#allocation5 + $0x48] sm:$0xff]
        %v235 = vld [vmem:[#allocation5 + $0x50] sm:$0xff]
        %v236 = vld [vmem:[#allocation5 + $0x58] sm:$0xff]
        %v237 = vld [vmem:[#allocation5 + $0x60] sm:$0xff]
        %v238 = vld [vmem:[#allocation5 + $0x68] sm:$0xff]
        %v239 = vld [vmem:[#allocation5 + $0x70] sm:$0xff]
        %v240 = vld [vmem:[#allocation5 + $0x78] sm:$0xff]
        %v241 = vld [vmem:[#allocation5 + $0x80] sm:$0xff]
        %v242 = vld [vmem:[#allocation5 + $0x88] sm:$0xff]
        %v243 = vld [vmem:[#allocation5 + $0x90] sm:$0xff]
        %v244 = vld [vmem:[#allocation5 + $0x98] sm:$0xff]
        %v245 = vld [vmem:[#allocation5 + $0xa0] sm:$0xff]
        %v246 = vld [vmem:[#allocation5 + $0xa8] sm:$0xff]
        %v247 = vld [vmem:[#allocation5 + $0xb0] sm:$0xff]
        %v248 = vld [vmem:[#allocation5 + $0xb8] sm:$0xff]
        %v249 = vld [vmem:[#allocation5 + $0xc0] sm:$0xff]
        %v250 = vld [vmem:[#allocation5 + $0xc8] sm:$0xff]
        %v251 = vld [vmem:[#allocation5 + $0xd0] sm:$0xff]
        %v252 = vld [vmem:[#allocation5 + $0xd8] sm:$0xff]
        %v253 = vld [vmem:[#allocation5 + $0xe0] sm:$0xff]
        %v254 = vld [vmem:[#allocation5 + $0xe8] sm:$0xff]
        %v255 = vld [vmem:[#allocation5 + $0xf0] sm:$0xff]
        %v256 = vld [vmem:[#allocation5 + $0xf8] sm:$0xff]
        %v257 = vld [vmem:[#allocation5 + $0x100] sm:$0xff]
        %v258 = vld [vmem:[#allocation5 + $0x108] sm:$0xff]
        %v259 = vld [vmem:[#allocation5 + $0x110] sm:$0xff]
        %v260 = vld [vmem:[#allocation5 + $0x118] sm:$0xff]
        %v261 = vld [vmem:[#allocation5 + $0x120] sm:$0xff]
        %v262 = vld [vmem:[#allocation5 + $0x128] sm:$0xff]
        %v263 = vld [vmem:[#allocation5 + $0x130] sm:$0xff]
        %v264 = vld [vmem:[#allocation5 + $0x138] sm:$0xff]
        %v265 = vld [vmem:[#allocation5 + $0x140] sm:$0xff]
        %v266 = vld [vmem:[#allocation5 + $0x148] sm:$0xff]
        %v267 = vld [vmem:[#allocation5 + $0x150] sm:$0xff]
        %v268 = vld [vmem:[#allocation5 + $0x158] sm:$0xff]
        %v269 = vld [vmem:[#allocation5 + $0x160] sm:$0xff]
        %v270 = vld [vmem:[#allocation5 + $0x168] sm:$0xff]
        %v271 = vld [vmem:[#allocation5 + $0x170] sm:$0xff]
        %v272 = vld [vmem:[#allocation5 + $0x178] sm:$0xff]
        %v273 = vld [vmem:[#allocation5 + $0x180] sm:$0xff]
        %v274 = vld [vmem:[#allocation5 + $0x188] sm:$0xff]
        %v275 = vld [vmem:[#allocation5 + $0x190] sm:$0xff]
        %v276 = vld [vmem:[#allocation5 + $0x198] sm:$0xff]
        %v277 = vld [vmem:[#allocation5 + $0x1a0] sm:$0xff]
        %v278 = vld [vmem:[#allocation5 + $0x1a8] sm:$0xff]
        %v279 = vld [vmem:[#allocation5 + $0x1b0] sm:$0xff]
        %v280 = vld [vmem:[#allocation5 + $0x1b8] sm:$0xff]
        %v281 = vld [vmem:[#allocation5 + $0x1c0] sm:$0xff]
        %v282 = vld [vmem:[#allocation5 + $0x1c8] sm:$0xff]
        %v283 = vld [vmem:[#allocation5 + $0x1d0] sm:$0xff]
        %v284 = vld [vmem:[#allocation5 + $0x1d8] sm:$0xff]
        %v285 = vld [vmem:[#allocation5 + $0x1e0] sm:$0xff]
        %v286 = vld [vmem:[#allocation5 + $0x1e8] sm:$0xff]
        %v287 = vld [vmem:[#allocation5 + $0x1f0] sm:$0xff]
        %v288 = vld [vmem:[#allocation5 + $0x1f8] sm:$0xff]
        %v289 = vld [vmem:[#allocation5 + $0x200] sm:$0xff]
        %v290 = vld [vmem:[#allocation5 + $0x208] sm:$0xff]
        %v291 = vld [vmem:[#allocation5 + $0x210] sm:$0xff]
        %v292 = vld [vmem:[#allocation5 + $0x218] sm:$0xff]
        %v293 = vld [vmem:[#allocation5 + $0x220] sm:$0xff]
        %v294 = vld [vmem:[#allocation5 + $0x228] sm:$0xff]
        %v295 = vld [vmem:[#allocation5 + $0x230] sm:$0xff]
        %v296 = vld [vmem:[#allocation5 + $0x238] sm:$0xff]
        %v297 = vld [vmem:[#allocation5 + $0x240] sm:$0xff]
        %v298 = vld [vmem:[#allocation5 + $0x248] sm:$0xff]
        %v299 = vld [vmem:[#allocation5 + $0x250] sm:$0xff]
        %v300 = vld [vmem:[#allocation5 + $0x258] sm:$0xff]
        %v301 = vld [vmem:[#allocation5 + $0x260] sm:$0xff]
        %v302 = vld [vmem:[#allocation5 + $0x268] sm:$0xff]
        %v303 = vld [vmem:[#allocation5 + $0x270] sm:$0xff]
        %v304 = vld [vmem:[#allocation5 + $0x278] sm:$0xff]
        %v305 = vld [vmem:[#allocation5 + $0x280] sm:$0xff]
        %v306 = vld [vmem:[#allocation5 + $0x288] sm:$0xff]
        %v307 = vld [vmem:[#allocation5 + $0x290] sm:$0xff]
        %v308 = vld [vmem:[#allocation5 + $0x298] sm:$0xff]
        %v309 = vld [vmem:[#allocation5 + $0x2a0] sm:$0xff]
        %v310 = vld [vmem:[#allocation5 + $0x2a8] sm:$0xff]
        %v311 = vld [vmem:[#allocation5 + $0x2b0] sm:$0xff]
        %v312 = vld [vmem:[#allocation5 + $0x2b8] sm:$0xff]
        %v313 = vld [vmem:[#allocation5 + $0x2c0] sm:$0xff]
        %v314 = vld [vmem:[#allocation5 + $0x2c8] sm:$0xff]
        %v315 = vld [vmem:[#allocation5 + $0x2d0] sm:$0xff]
        %v316 = vld [vmem:[#allocation5 + $0x2d8] sm:$0xff]
        %v317 = vld [vmem:[#allocation5 + $0x2e0] sm:$0xff]
        %v318 = vld [vmem:[#allocation5 + $0x2e8] sm:$0xff]
        %v319 = vld [vmem:[#allocation5 + $0x2f0] sm:$0xff]
        %v320 = vld [vmem:[#allocation5 + $0x2f8] sm:$0xff]
        %v321 = vld [vmem:[#allocation5 + $0x300] sm:$0xff]
        %v322 = vld [vmem:[#allocation5 + $0x308] sm:$0xff]
        %v323 = vld [vmem:[#allocation5 + $0x310] sm:$0xff]
        %v324 = vld [vmem:[#allocation5 + $0x318] sm:$0xff]
        %v325 = vld [vmem:[#allocation5 + $0x320] sm:$0xff]
        %v326 = vld [vmem:[#allocation5 + $0x328] sm:$0xff]
        %v327 = vld [vmem:[#allocation5 + $0x330] sm:$0xff]
        %v328 = vld [vmem:[#allocation5 + $0x338] sm:$0xff]
        %v329 = vld [vmem:[#allocation5 + $0x340] sm:$0xff]
        %v330 = vld [vmem:[#allocation5 + $0x348] sm:$0xff]
        %v331 = vld [vmem:[#allocation5 + $0x350] sm:$0xff]
        %v332 = vld [vmem:[#allocation5 + $0x358] sm:$0xff]
        %v333 = vld [vmem:[#allocation5 + $0x360] sm:$0xff]
        %v334 = vld [vmem:[#allocation5 + $0x368] sm:$0xff]
        %v335 = vld [vmem:[#allocation5 + $0x370] sm:$0xff]
        %v336 = vld [vmem:[#allocation5 + $0x378] sm:$0xff]
        %v337 = vld [vmem:[#allocation5 + $0x380] sm:$0xff]
        %v338 = vld [vmem:[#allocation5 + $0x388] sm:$0xff]
        %v339 = vld [vmem:[#allocation5 + $0x390] sm:$0xff]
        %v340 = vld [vmem:[#allocation5 + $0x398] sm:$0xff]
        %v341 = vld [vmem:[#allocation5 + $0x3a0] sm:$0xff]
        %v342 = vld [vmem:[#allocation5 + $0x3a8] sm:$0xff]
        %v343 = vld [vmem:[#allocation5 + $0x3b0] sm:$0xff]
        %v344 = vld [vmem:[#allocation5 + $0x3b8] sm:$0xff]
        %v345 = vld [vmem:[#allocation5 + $0x3c0] sm:$0xff]
        %v346 = vld [vmem:[#allocation5 + $0x3c8] sm:$0xff]
        %v347 = vld [vmem:[#allocation5 + $0x3d0] sm:$0xff]
        %v348 = vld [vmem:[#allocation5 + $0x3d8] sm:$0xff]
        %v349 = vld [vmem:[#allocation5 + $0x3e0] sm:$0xff]
        %v350 = vld [vmem:[#allocation5 + $0x3e8] sm:$0xff]
        %v351 = vld [vmem:[#allocation5 + $0x3f0] sm:$0xff]
        %v352 = vld [vmem:[#allocation5 + $0x3f8] sm:$0xff]
        %v353 = vld [vmem:[%s2] sm:$0x1]
        %v355 = vlaneseq
        %v356 = vshrl.u32 %v355, 7
        %v357 = vsub.s32 0, %v356
        %v358 = vrot.slane %v353, %v357
        %v362 = vcombine.high %v223, %v223
        %v364 = vunpack.c.l.s4 1983009808
        %v365 = vunpack.c.0.s8 %v364
        %v366 = vlaneseq
        %v367 = vshrl.u32 %v366, 7
        %v368 = vsub.s32 %v365, %v367
        %v369 = vrot.slane %v223, %v368
        %v371 = vunpack.c.l.s4 1983009808
        %v372 = vunpack.c.0.s8 %v371
        %v373 = vlaneseq
        %v374 = vshrl.u32 %v373, 7
        %v375 = vsub.s32 %v372, %v374
        %v376 = vrot.slane %v362, %v375
        %v377 = vcombine.high %v369, %v369
        %v378 = vcombine.high %v376, %v376
        %v379 = vcombine.high %v224, %v224
        %v381 = vunpack.c.l.s4 1983009808
        %v382 = vunpack.c.0.s8 %v381
        %v383 = vlaneseq
        %v384 = vshrl.u32 %v383, 7
        %v385 = vsub.s32 %v382, %v384
        %v386 = vrot.slane %v224, %v385
        %v388 = vunpack.c.l.s4 1983009808
        %v389 = vunpack.c.0.s8 %v388
        %v390 = vlaneseq
        %v391 = vshrl.u32 %v390, 7
        %v392 = vsub.s32 %v389, %v391
        %v393 = vrot.slane %v379, %v392
        %v394 = vcombine.high %v386, %v386
        %v395 = vcombine.high %v393, %v393
        %404 = vmatprep.subr.mxu0 0.0
        %405 = vmatpush1.msra.mxu0 %v240
        %406 = vmatprep.subr.mxu0 0.0
        %407 = vmatpush1.msra.mxu0 %v239
        %408 = vmatprep.subr.mxu0 0.0
        %409 = vmatpush1.msra.mxu0 %v238
        %410 = vmatprep.subr.mxu0 0.0
        %411 = vmatpush1.msra.mxu0 %v237
        %412 = vmatprep.subr.mxu0 0.0
        %413 = vmatpush1.msra.mxu0 %v236
        %414 = vmatprep.subr.mxu0 0.0
        %415 = vmatpush1.msra.mxu0 %v235
        %416 = vmatprep.subr.mxu0 0.0
        %417 = vmatpush1.msra.mxu0 %v234
        %418 = vmatprep.subr.mxu0 0.0
        %419 = vmatpush1.msra.mxu0 %v233
        %420 = vmatprep.subr.mxu0 0.0
        %421 = vmatpush1.msra.mxu0 %v232
        %422 = vmatprep.subr.mxu0 0.0
        %423 = vmatpush1.msra.mxu0 %v231
        %424 = vmatprep.subr.mxu0 0.0
        %425 = vmatpush1.msra.mxu0 %v230
        %426 = vmatprep.subr.mxu0 0.0
        %427 = vmatpush1.msra.mxu0 %v229
        %428 = vmatprep.subr.mxu0 0.0
        %429 = vmatpush1.msra.mxu0 %v228
        %430 = vmatprep.subr.mxu0 0.0
        %431 = vmatpush1.msra.mxu0 %v227
        %432 = vmatprep.subr.mxu0 0.0
        %433 = vmatpush1.msra.mxu0 %v226
        %434 = vmatprep.subr.mxu0 0.0
        %435 = vmatpush1.msra.mxu0 %v225
        %436 = vmatprep.subr.mxu0 0.0
        %437 = vmatpush2.msra.mxu0 %v256
        %438 = vmatprep.subr.mxu0 0.0
        %439 = vmatpush2.msra.mxu0 %v255
        %440 = vmatprep.subr.mxu0 0.0
        %441 = vmatpush2.msra.mxu0 %v254
        %442 = vmatprep.subr.mxu0 0.0
        %443 = vmatpush2.msra.mxu0 %v253
        %444 = vmatprep.subr.mxu0 0.0
        %445 = vmatpush2.msra.mxu0 %v252
        %446 = vmatprep.subr.mxu0 0.0
        %447 = vmatpush2.msra.mxu0 %v251
        %448 = vmatprep.subr.mxu0 0.0
        %449 = vmatpush2.msra.mxu0 %v250
        %450 = vmatprep.subr.mxu0 0.0
        %451 = vmatpush2.msra.mxu0 %v249
        %452 = vmatprep.subr.mxu0 0.0
        %453 = vmatpush2.msra.mxu0 %v248
        %454 = vmatprep.subr.mxu0 0.0
        %455 = vmatpush2.msra.mxu0 %v247
        %456 = vmatprep.subr.mxu0 0.0
        %457 = vmatpush2.msra.mxu0 %v246
        %458 = vmatprep.subr.mxu0 0.0
        %459 = vmatpush2.msra.mxu0 %v245
        %460 = vmatprep.subr.mxu0 0.0
        %461 = vmatpush2.msra.mxu0 %v244
        %462 = vmatprep.subr.mxu0 0.0
        %463 = vmatpush2.msra.mxu0 %v243
        %464 = vmatprep.subr.mxu0 0.0
        %465 = vmatpush2.msra.mxu0 %v242
        %466 = vmatprep.subr.mxu0 0.0
        %467 = vmatpush2.msra.mxu0 %v241
        %468 = vmatprep.mubr.f32.mxu0 %v377
        %469 = vmatmul.mubr.f32.gmra.mxu0 %v369
        %v470 = vpop.f32.mrf.mxu0
        %v471 = vadd.f32 %v358, %v470
        %v472 = vpop.f32.mrf.mxu0
        %473 = vdwg.mxu0
        %474 = vmatprep.subr.mxu0 0.0
        %475 = vmatpush1.msra.mxu0 %v272
        %476 = vmatprep.subr.mxu0 0.0
        %477 = vmatpush1.msra.mxu0 %v271
        %478 = vmatprep.subr.mxu0 0.0
        %479 = vmatpush1.msra.mxu0 %v270
        %480 = vmatprep.subr.mxu0 0.0
        %481 = vmatpush1.msra.mxu0 %v269
        %482 = vmatprep.subr.mxu0 0.0
        %483 = vmatpush1.msra.mxu0 %v268
        %484 = vmatprep.subr.mxu0 0.0
        %485 = vmatpush1.msra.mxu0 %v267
        %486 = vmatprep.subr.mxu0 0.0
        %487 = vmatpush1.msra.mxu0 %v266
        %488 = vmatprep.subr.mxu0 0.0
        %489 = vmatpush1.msra.mxu0 %v265
        %490 = vmatprep.subr.mxu0 0.0
        %491 = vmatpush1.msra.mxu0 %v264
        %492 = vmatprep.subr.mxu0 0.0
        %493 = vmatpush1.msra.mxu0 %v263
        %494 = vmatprep.subr.mxu0 0.0
        %495 = vmatpush1.msra.mxu0 %v262
        %496 = vmatprep.subr.mxu0 0.0
        %497 = vmatpush1.msra.mxu0 %v261
        %498 = vmatprep.subr.mxu0 0.0
        %499 = vmatpush1.msra.mxu0 %v260
        %500 = vmatprep.subr.mxu0 0.0
        %501 = vmatpush1.msra.mxu0 %v259
        %502 = vmatprep.subr.mxu0 0.0
        %503 = vmatpush1.msra.mxu0 %v258
        %504 = vmatprep.subr.mxu0 0.0
        %505 = vmatpush1.msra.mxu0 %v257
        %506 = vmatprep.subr.mxu0 0.0
        %507 = vmatpush2.msra.mxu0 %v288
        %508 = vmatprep.subr.mxu0 0.0
        %509 = vmatpush2.msra.mxu0 %v287
        %510 = vmatprep.subr.mxu0 0.0
        %511 = vmatpush2.msra.mxu0 %v286
        %512 = vmatprep.subr.mxu0 0.0
        %513 = vmatpush2.msra.mxu0 %v285
        %514 = vmatprep.subr.mxu0 0.0
        %515 = vmatpush2.msra.mxu0 %v284
        %516 = vmatprep.subr.mxu0 0.0
        %517 = vmatpush2.msra.mxu0 %v283
        %518 = vmatprep.subr.mxu0 0.0
        %519 = vmatpush2.msra.mxu0 %v282
        %520 = vmatprep.subr.mxu0 0.0
        %521 = vmatpush2.msra.mxu0 %v281
        %522 = vmatprep.subr.mxu0 0.0
        %523 = vmatpush2.msra.mxu0 %v280
        %524 = vmatprep.subr.mxu0 0.0
        %525 = vmatpush2.msra.mxu0 %v279
        %526 = vmatprep.subr.mxu0 0.0
        %527 = vmatpush2.msra.mxu0 %v278
        %528 = vmatprep.subr.mxu0 0.0
        %529 = vmatpush2.msra.mxu0 %v277
        %530 = vmatprep.subr.mxu0 0.0
        %531 = vmatpush2.msra.mxu0 %v276
        %532 = vmatprep.subr.mxu0 0.0
        %533 = vmatpush2.msra.mxu0 %v275
        %534 = vmatprep.subr.mxu0 0.0
        %535 = vmatpush2.msra.mxu0 %v274
        %536 = vmatprep.subr.mxu0 0.0
        %537 = vmatpush2.msra.mxu0 %v273
        %538 = vmatprep.mubr.f32.mxu0 %v378
        %539 = vmatmul.mubr.f32.gmra.mxu0 %v376
        %v540 = vpop.f32.mrf.mxu0
        %v541 = vadd.f32 %v471, %v540
        %v542 = vpop.f32.mrf.mxu0
        %543 = vdwg.mxu0
        %544 = vmatprep.subr.mxu0 0.0
        %545 = vmatpush1.msra.mxu0 %v304
        %546 = vmatprep.subr.mxu0 0.0
        %547 = vmatpush1.msra.mxu0 %v303
        %548 = vmatprep.subr.mxu0 0.0
        %549 = vmatpush1.msra.mxu0 %v302
        %550 = vmatprep.subr.mxu0 0.0
        %551 = vmatpush1.msra.mxu0 %v301
        %552 = vmatprep.subr.mxu0 0.0
        %553 = vmatpush1.msra.mxu0 %v300
        %554 = vmatprep.subr.mxu0 0.0
        %555 = vmatpush1.msra.mxu0 %v299
        %556 = vmatprep.subr.mxu0 0.0
        %557 = vmatpush1.msra.mxu0 %v298
        %558 = vmatprep.subr.mxu0 0.0
        %559 = vmatpush1.msra.mxu0 %v297
        %560 = vmatprep.subr.mxu0 0.0
        %561 = vmatpush1.msra.mxu0 %v296
        %562 = vmatprep.subr.mxu0 0.0
        %563 = vmatpush1.msra.mxu0 %v295
        %564 = vmatprep.subr.mxu0 0.0
        %565 = vmatpush1.msra.mxu0 %v294
        %566 = vmatprep.subr.mxu0 0.0
        %567 = vmatpush1.msra.mxu0 %v293
        %568 = vmatprep.subr.mxu0 0.0
        %569 = vmatpush1.msra.mxu0 %v292
        %570 = vmatprep.subr.mxu0 0.0
        %571 = vmatpush1.msra.mxu0 %v291
        %572 = vmatprep.subr.mxu0 0.0
        %573 = vmatpush1.msra.mxu0 %v290
        %574 = vmatprep.subr.mxu0 0.0
        %575 = vmatpush1.msra.mxu0 %v289
        %576 = vmatprep.subr.mxu0 0.0
        %577 = vmatpush2.msra.mxu0 %v320
        %578 = vmatprep.subr.mxu0 0.0
        %579 = vmatpush2.msra.mxu0 %v319
        %580 = vmatprep.subr.mxu0 0.0
        %581 = vmatpush2.msra.mxu0 %v318
        %582 = vmatprep.subr.mxu0 0.0
        %583 = vmatpush2.msra.mxu0 %v317
        %584 = vmatprep.subr.mxu0 0.0
        %585 = vmatpush2.msra.mxu0 %v316
        %586 = vmatprep.subr.mxu0 0.0
        %587 = vmatpush2.msra.mxu0 %v315
        %588 = vmatprep.subr.mxu0 0.0
        %589 = vmatpush2.msra.mxu0 %v314
        %590 = vmatprep.subr.mxu0 0.0
        %591 = vmatpush2.msra.mxu0 %v313
        %592 = vmatprep.subr.mxu0 0.0
        %593 = vmatpush2.msra.mxu0 %v312
        %594 = vmatprep.subr.mxu0 0.0
        %595 = vmatpush2.msra.mxu0 %v311
        %596 = vmatprep.subr.mxu0 0.0
        %597 = vmatpush2.msra.mxu0 %v310
        %598 = vmatprep.subr.mxu0 0.0
        %599 = vmatpush2.msra.mxu0 %v309
        %600 = vmatprep.subr.mxu0 0.0
        %601 = vmatpush2.msra.mxu0 %v308
        %602 = vmatprep.subr.mxu0 0.0
        %603 = vmatpush2.msra.mxu0 %v307
        %604 = vmatprep.subr.mxu0 0.0
        %605 = vmatpush2.msra.mxu0 %v306
        %606 = vmatprep.subr.mxu0 0.0
        %607 = vmatpush2.msra.mxu0 %v305
        %608 = vmatprep.mubr.f32.mxu0 %v394
        %609 = vmatmul.mubr.f32.gmra.mxu0 %v386
        %v610 = vpop.f32.mrf.mxu0
        %v611 = vadd.f32 %v541, %v610
        %v612 = vpop.f32.mrf.mxu0
        %613 = vdwg.mxu0
        %614 = vmatprep.subr.mxu0 0.0
        %615 = vmatpush1.msra.mxu0 %v336
        %616 = vmatprep.subr.mxu0 0.0
        %617 = vmatpush1.msra.mxu0 %v335
        %618 = vmatprep.subr.mxu0 0.0
        %619 = vmatpush1.msra.mxu0 %v334
        %620 = vmatprep.subr.mxu0 0.0
        %621 = vmatpush1.msra.mxu0 %v333
        %622 = vmatprep.subr.mxu0 0.0
        %623 = vmatpush1.msra.mxu0 %v332
        %624 = vmatprep.subr.mxu0 0.0
        %625 = vmatpush1.msra.mxu0 %v331
        %626 = vmatprep.subr.mxu0 0.0
        %627 = vmatpush1.msra.mxu0 %v330
        %628 = vmatprep.subr.mxu0 0.0
        %629 = vmatpush1.msra.mxu0 %v329
        %630 = vmatprep.subr.mxu0 0.0
        %631 = vmatpush1.msra.mxu0 %v328
        %632 = vmatprep.subr.mxu0 0.0
        %633 = vmatpush1.msra.mxu0 %v327
        %634 = vmatprep.subr.mxu0 0.0
        %635 = vmatpush1.msra.mxu0 %v326
        %636 = vmatprep.subr.mxu0 0.0
        %637 = vmatpush1.msra.mxu0 %v325
        %638 = vmatprep.subr.mxu0 0.0
        %639 = vmatpush1.msra.mxu0 %v324
        %640 = vmatprep.subr.mxu0 0.0
        %641 = vmatpush1.msra.mxu0 %v323
        %642 = vmatprep.subr.mxu0 0.0
        %643 = vmatpush1.msra.mxu0 %v322
        %644 = vmatprep.subr.mxu0 0.0
        %645 = vmatpush1.msra.mxu0 %v321
        %646 = vmatprep.subr.mxu0 0.0
        %647 = vmatpush2.msra.mxu0 %v352
        %648 = vmatprep.subr.mxu0 0.0
        %649 = vmatpush2.msra.mxu0 %v351
        %650 = vmatprep.subr.mxu0 0.0
        %651 = vmatpush2.msra.mxu0 %v350
        %652 = vmatprep.subr.mxu0 0.0
        %653 = vmatpush2.msra.mxu0 %v349
        %654 = vmatprep.subr.mxu0 0.0
        %655 = vmatpush2.msra.mxu0 %v348
        %656 = vmatprep.subr.mxu0 0.0
        %657 = vmatpush2.msra.mxu0 %v347
        %658 = vmatprep.subr.mxu0 0.0
        %659 = vmatpush2.msra.mxu0 %v346
        %660 = vmatprep.subr.mxu0 0.0
        %661 = vmatpush2.msra.mxu0 %v345
        %662 = vmatprep.subr.mxu0 0.0
        %663 = vmatpush2.msra.mxu0 %v344
        %664 = vmatprep.subr.mxu0 0.0
        %665 = vmatpush2.msra.mxu0 %v343
        %666 = vmatprep.subr.mxu0 0.0
        %667 = vmatpush2.msra.mxu0 %v342
        %668 = vmatprep.subr.mxu0 0.0
        %669 = vmatpush2.msra.mxu0 %v341
        %670 = vmatprep.subr.mxu0 0.0
        %671 = vmatpush2.msra.mxu0 %v340
        %672 = vmatprep.subr.mxu0 0.0
        %673 = vmatpush2.msra.mxu0 %v339
        %674 = vmatprep.subr.mxu0 0.0
        %675 = vmatpush2.msra.mxu0 %v338
        %676 = vmatprep.subr.mxu0 0.0
        %677 = vmatpush2.msra.mxu0 %v337
        %678 = vmatprep.mubr.f32.mxu0 %v395
        %679 = vmatmul.mubr.f32.gmra.mxu0 %v393
        %v680 = vpop.f32.mrf.mxu0
        %v681 = vadd.f32 %v611, %v680
        %v682 = vpop.f32.mrf.mxu0
        %683 = vdwg.mxu0
        %vm684 = vcmask 1041408
        %v685 = vsel %vm684, %v681, -inf
        %686 = vmax.xlane.f32.xlu0 %v685
        %v687 = vpop.xlane.xlu0 %686
        %v688 = vsub.f32 %v681, %v687
        %v689 = vmul.f32 %v688, 1.442695
        %v690 = vpow.pop %v689
        %v691 = vsel %vm684, %v690, 0.0
        %692 = vadd.xlane.f32.xlu0 %v691
        %v693 = vpop.xlane.xlu0 %692
        %v694 = vrcp.pop %v693
        %v695 = vmul.f32 %v690, %v694
        %s696 = smul.u32 %s26, 2
        %s697 = ssub.s32 2, %s696
        %v698 = vlaneseq
        %v699 = vshrl.u32 %v698, 7
        %v700 = vstv %s697
        %vm701 = vcmp.lt.s32.totalorder %v699, %v700
        %v702 = vsel %vm701, 1, 0
        %vm703 = vcmp.eq.s32.totalorder %v702, 1
        %v704 = vsel %vm703, %v695, 0.0
        %v705 = vld [vmem:[%s217] sm:$0xff]
        %v706 = vsel %vm684, %v704, 0.0
        %v707 = vrot.slane %v706, 4
        %v708 = vadd.f32 %v706, %v707
        %v709 = vrot.slane %v708, 2
        %v710 = vadd.f32 %v708, %v709
        %v711 = vrot.slane %v710, 1
        %v712 = vadd.f32 %v710, %v711
        %v713 = vadd.f32 %v705, %v712
        %714 = vst [vmem:[%s217] sm:$0xff] %v713
        // Predicated region
        $region45: #{tpu_custom_call.1} parent=31 // pred_check
          %p715 = pneg %p218
        $region46: #{tpu_custom_call.1} parent=31 // pred_check_branch
          %717 = sbr.rel (%p715) target = $region48
        $region47: #{tpu_custom_call.1} parent=31 // pred_region
          %v718 = vld [vmem:[%s217] sm:$0xff]
          %v719 = vmul.f32 %v718, 0.5
          %720 = vst [vmem:[%s217] sm:$0xff] %v719
        $region48: #{tpu_custom_call.1} parent=31 // pred_fallthru
          _
        %s721 = sand.u32 %s111, 1
        %s722 = scalar_lea.sflag [#allocation4], %s721
        %s723 = sand.u32 %s111, 1
        %s724 = smul.addr %s723, 8
        %s725 = scalar_lea.vmem [#allocation7], %s724
        // Predicated region
        $region49: #{tpu_custom_call.1} parent=31 // pred_check
          %p726 = pneg %p121
        $region50: #{tpu_custom_call.1} parent=31 // pred_check_branch
          %728 = sbr.rel (%p726) target = $region52
        $region51: #{tpu_custom_call.1} parent=31 // pred_region
          %s730 = ssub.s32 128, 128
          %731 = vsyncadd %s722, %s730
          %s732 = smul.addr %s25, 128
          %s733 = scalar_lea.hbm %s3, %s732
          %s735 = sshll.u32 %s725, 4
          %s736 = int_to_ptr.vmem [resolvable:$true] %s735
          %738 = dma.vmem_to_hbm [thread:$0]  %s736, 128, %s733, %s722
        $region52: #{tpu_custom_call.1} parent=31 // pred_fallthru
          _
      $region32: #{tpu_custom_call.1} parent=5 // pred_fallthru
        _
      %p739 = scmp.le.s32.totalorder 2, %s16
      // Predicated region
      $region53: #{tpu_custom_call.1} parent=5 // pred_check
        %p740 = pneg %p739
      $region54: #{tpu_custom_call.1} parent=5 // pred_check_branch
        %742 = sbr.rel (%p740) target = $region56
      $region55: #{tpu_custom_call.1} parent=5 // pred_region
        %s743 = ssub.s32 %s16, 2
        // Predicated region
        $region57: #{tpu_custom_call.1} parent=55 // pred_check
          %p744 = pneg %p127
        $region58: #{tpu_custom_call.1} parent=55 // pred_check_branch
          %746 = sbr.rel (%p744) target = $region60
        $region59: #{tpu_custom_call.1} parent=55 // pred_region
          %s747 = sand.u32 %s112, 1
          %s748 = scalar_lea.sflag [#allocation4], %s747
          %s749 = sand.u32 %s112, 1
          %s750 = smul.addr %s749, 8
          %s751 = scalar_lea.vmem [#allocation7], %s750
          %752 = dma.done %s748, 128
        $region60: #{tpu_custom_call.1} parent=55 // pred_fallthru
          _
      $region56: #{tpu_custom_call.1} parent=5 // pred_fallthru
        _
    $region6: #{tpu_custom_call.1} parent=1 // loop_footer
      %s20 = sadd.s32 1, %s16
    $region7: #{tpu_custom_call.1} parent=1 // loop_footer_branch
      %15 = sbr.rel target = $region3
    $region8: #{tpu_custom_call.1} parent=1 // loop_exit
      _
    %753 = vsyncpa [#allocation3], 1
    %s754 = scalar_lea.sflag [#allocation3], 1
    %755 = vsyncpa %s754, 1
    %756 = vsyncpa [#allocation6], 1
    %757 = vsyncpa [#allocation4], 1
    %s758 = scalar_lea.sflag [#allocation4], 1
    %759 = vsyncpa %s758, 1

</llo_original>
